<compile_context>
chip_gen: v6e
topology: v6e:2x2x1
jax: 0.10.0
libtpu: 0.0.40
codegen_flags: <defaults>
</compile_context>

<pallas_src>
import functools

import jax
import jax.numpy as jnp
from jax.experimental import pallas as pl
from jax.experimental.pallas import tpu as pltpu


def _round_up(x, m):
    return ((x + m - 1) // m) * m


def rel_floor_kernel(floors_ref, enc_ref, w_enc_ref, delta_ref, bias_ref, out_ref):
    # floors_ref: [TB, 2] int32  (col 0 = src, col 1 = tgt)
    # same: [TB, 1] float32
    same = (floors_ref[:, 0:1] == floors_ref[:, 1:2]).astype(jnp.float32)

    # Encoding contribution on the MXU: bf16 x bf16 -> f32 accumulate.
    acc = jnp.dot(enc_ref[...], w_enc_ref[...], preferred_element_type=jnp.float32)

    # One-hot contribution + bias, folded to: same * delta + bias_eff.
    out_ref[...] = (acc + same * delta_ref[...] + bias_ref[...]).astype(out_ref.dtype)


@functools.partial(jax.jit, static_argnames=("block_b",))
def rel_floor_one_hot_encoder(encodings, src_floors, tgt_floors, w, b, *, block_b=256):
    """
    encodings : [B, D]   float32
    src_floors: [B]      int32
    tgt_floors: [B]      int32
    w         : [D+2, D] float32  (Linear weight transposed to in x out)
    b         : [D]      float32
    returns   : [B, D]   float32
    """
    B, D = encodings.shape
    assert w.shape == (D + 2, D)

    # ---- Constant folding on static weights (trace-time, once). ----
    w_enc = w[:D, :].astype(jnp.bfloat16)                  # [D, D]  MXU operand
    delta = (w[D, :] - w[D + 1, :]).reshape(1, D)          # [1, D]  f32
    bias_eff = (b + w[D + 1, :]).reshape(1, D)             # [1, D]  f32

    # ---- Pack floors into one [B, 2] int32 array. ----
    floors = jnp.stack(
        [src_floors.astype(jnp.int32), tgt_floors.astype(jnp.int32)], axis=1
    )                                                      # [B, 2]

    # ---- Tile the batch: TB multiple of 8, modest VMEM footprint. ----
    TB = min(block_b, _round_up(B, 8))
    TB = _round_up(TB, 8)
    B_pad = _round_up(B, TB)

    enc_bf16 = encodings.astype(jnp.bfloat16)
    if B_pad != B:
        pad = B_pad - B
        enc_bf16 = jnp.pad(enc_bf16, ((0, pad), (0, 0)))
        floors = jnp.pad(floors, ((0, pad), (0, 0)))

    out = pl.pallas_call(
        rel_floor_kernel,
        out_shape=jax.ShapeDtypeStruct((B_pad, D), jnp.float32),
        grid=(B_pad // TB,),
        in_specs=[
            pl.BlockSpec((TB, 2), lambda i: (i, 0)),   # floors (packed src/tgt)
            pl.BlockSpec((TB, D), lambda i: (i, 0)),   # encodings tile
            pl.BlockSpec((D, D), lambda i: (0, 0)),    # w_enc   (VMEM resident)
            pl.BlockSpec((1, D), lambda i: (0, 0)),    # delta   (VMEM resident)
            pl.BlockSpec((1, D), lambda i: (0, 0)),    # bias_eff(VMEM resident)
        ],
        out_specs=pl.BlockSpec((TB, D), lambda i: (i, 0)),
        compiler_params=pltpu.CompilerParams(
            # Batch axis is embarrassingly parallel -> shard across TCs (v7x).
            dimension_semantics=("parallel",),
        ),
    )(floors, enc_bf16, w_enc, delta, bias_eff)

    return out[:B]


def reference(encodings, src_floors, tgt_floors, w, b):
    same = (src_floors == tgt_floors).astype(jnp.float32)
    one_hot = jnp.stack([same, 1.0 - same], axis=1)
    x = jnp.concatenate([encodings, one_hot], axis=1)
    return x @ w + b


if __name__ == "__main__":
    B = 8
    D = 32  # input_dim

    key = jax.random.PRNGKey(0)
    k_enc, k_src, k_tgt, k_w, k_b = jax.random.split(key, 5)

    encodings = jax.random.normal(k_enc, (B, D), dtype=jnp.float32)
    src_floors = jax.random.randint(k_src, (B,), 0, 3, dtype=jnp.int32)
    tgt_floors = jax.random.randint(k_tgt, (B,), 0, 3, dtype=jnp.int32)

    # Deterministic synthetic Linear(input_dim + 2, input_dim) parameters,
    # stored as [in, out] = [D+2, D] (PyTorch weight transposed).
    w = 0.1 * jax.random.normal(k_w, (D + 2, D), dtype=jnp.float32)
    b = 0.1 * jax.random.normal(k_b, (D,), dtype=jnp.float32)

    out = rel_floor_one_hot_encoder(encodings, src_floors, tgt_floors, w, b)
    out = jax.block_until_ready(out)

    ref = reference(encodings, src_floors, tgt_floors, w, b)
    assert out.shape == (B, D)
    # bf16 MXU path vs f32 reference -> loose tolerance.
    assert jnp.allclose(out, ref, atol=2e-2, rtol=2e-2), (
        float(jnp.max(jnp.abs(out - ref)))
    )

    print("KERNEL_OK")
</pallas_src>

<mosaic_0001>
module attributes {stable_mosaic.version = 11 : i64} {
  func.func @rel_floor_kernel(%arg0: i32, %arg1: memref<8x2xi32, #tpu.memory_space<vmem>>, %arg2: memref<8x32xbf16, #tpu.memory_space<vmem>>, %arg3: memref<32x32xbf16, #tpu.memory_space<vmem>>, %arg4: memref<1x32xf32, #tpu.memory_space<vmem>>, %arg5: memref<1x32xf32, #tpu.memory_space<vmem>>, %arg6: memref<8x32xf32, #tpu.memory_space<vmem>>) attributes {dimension_semantics = [#tpu.dimension_semantics<parallel>], iteration_bounds = array<i64: 1>, scalar_prefetch = 0 : i64, scratch_operands = 0 : i64, tpu.core_type = #tpu.core_type<tc>, window_params = [{transform_indices = @transform_0, window_bounds = array<i64: 8, 2>}, {transform_indices = @transform_1, window_bounds = array<i64: 8, 32>}, {pipeline_mode = #tpu.pipeline_mode<synchronous>, transform_indices = @transform_2, window_bounds = array<i64: 32, 32>}, {pipeline_mode = #tpu.pipeline_mode<synchronous>, transform_indices = @transform_3, window_bounds = array<i64: 1, 32>}, {pipeline_mode = #tpu.pipeline_mode<synchronous>, transform_indices = @transform_4, window_bounds = array<i64: 1, 32>}, {transform_indices = @transform_5, window_bounds = array<i64: 8, 32>}]} {
    %c0 = arith.constant 0 : index
    %c0_0 = arith.constant 0 : index
    %0 = vector.load %arg1[%c0, %c0_0] : memref<8x2xi32, #tpu.memory_space<vmem>>, vector<8x1xi32>
    %c0_1 = arith.constant 0 : index
    %c1 = arith.constant 1 : index
    %1 = vector.load %arg1[%c0_1, %c1] : memref<8x2xi32, #tpu.memory_space<vmem>>, vector<8x1xi32>
    %2 = arith.cmpi eq, %0, %1 : vector<8x1xi32>
    %3 = arith.extui %2 : vector<8x1xi1> to vector<8x1xi32>
    %4 = arith.sitofp %3 : vector<8x1xi32> to vector<8x1xf32>
    %c0_2 = arith.constant 0 : index
    %c0_3 = arith.constant 0 : index
    %5 = vector.load %arg2[%c0_2, %c0_3] : memref<8x32xbf16, #tpu.memory_space<vmem>>, vector<8x32xbf16>
    %c0_4 = arith.constant 0 : index
    %c0_5 = arith.constant 0 : index
    %6 = vector.load %arg3[%c0_4, %c0_5] : memref<32x32xbf16, #tpu.memory_space<vmem>>, vector<32x32xbf16>
    %cst = arith.constant dense<0.000000e+00> : vector<8x32xf32>
    %7 = tpu.matmul %5, %6, %cst {dimension_numbers = #tpu.dot_dimension_numbers<[1], [0], [0], [1], [0, 0, 1, 1], [], []>} : vector<8x32xbf16>, vector<32x32xbf16>, vector<8x32xf32> -> vector<8x32xf32>
    %c0_6 = arith.constant 0 : index
    %c0_7 = arith.constant 0 : index
    %8 = vector.load %arg4[%c0_6, %c0_7] : memref<1x32xf32, #tpu.memory_space<vmem>>, vector<1x32xf32>
    %9 = vector.broadcast %4 : vector<8x1xf32> to vector<8x32xf32>
    %10 = vector.broadcast %8 : vector<1x32xf32> to vector<8x32xf32>
    %11 = arith.mulf %9, %10 : vector<8x32xf32>
    %12 = arith.addf %7, %11 : vector<8x32xf32>
    %c0_8 = arith.constant 0 : index
    %c0_9 = arith.constant 0 : index
    %13 = vector.load %arg5[%c0_8, %c0_9] : memref<1x32xf32, #tpu.memory_space<vmem>>, vector<1x32xf32>
    %14 = vector.broadcast %13 : vector<1x32xf32> to vector<8x32xf32>
    %15 = arith.addf %12, %14 : vector<8x32xf32>
    %c0_10 = arith.constant 0 : index
    %c0_11 = arith.constant 0 : index
    %16 = vector.load %arg6[%c0_10, %c0_11] : memref<8x32xf32, #tpu.memory_space<vmem>>, vector<8x32xf32>
    tpu.vector_store %arg6[%c0_10, %c0_11], %15 {strides = array<i32>} : memref<8x32xf32, #tpu.memory_space<vmem>>, vector<8x32xf32>,
    return
  }
  func.func @transform_0(%arg0: i32) -> (i32, i32) {
    %c0_i32 = arith.constant 0 : i32
    %c0_i32_0 = arith.constant 0 : i32
    return %arg0, %c0_i32 : i32, i32
  }
  func.func @transform_1(%arg0: i32) -> (i32, i32) {
    %c0_i32 = arith.constant 0 : i32
    %c0_i32_0 = arith.constant 0 : i32
    return %arg0, %c0_i32 : i32, i32
  }
  func.func @transform_2(%arg0: i32) -> (i32, i32) {
    %c0_i32 = arith.constant 0 : i32
    %c0_i32_0 = arith.constant 0 : i32
    %c0_i32_1 = arith.constant 0 : i32
    return %c0_i32, %c0_i32_0 : i32, i32
  }
  func.func @transform_3(%arg0: i32) -> (i32, i32) {
    %c0_i32 = arith.constant 0 : i32
    %c0_i32_0 = arith.constant 0 : i32
    %c0_i32_1 = arith.constant 0 : i32
    return %c0_i32, %c0_i32_0 : i32, i32
  }
  func.func @transform_4(%arg0: i32) -> (i32, i32) {
    %c0_i32 = arith.constant 0 : i32
    %c0_i32_0 = arith.constant 0 : i32
    %c0_i32_1 = arith.constant 0 : i32
    return %c0_i32, %c0_i32_0 : i32, i32
  }
  func.func @transform_5(%arg0: i32) -> (i32, i32) {
    %c0_i32 = arith.constant 0 : i32
    %c0_i32_0 = arith.constant 0 : i32
    return %arg0, %c0_i32 : i32, i32
  }
}

</mosaic_0001>

<llo_original>
// kernel: sub.0
$region0: #{sub.0}
  #allocation0 [shape = 's32[1]{0}', space=sflag, size = 0x4, scoped, tag = 'scoped memory for sub.0']
  %s0 = inlined_call_operand.vmem [shape: f32[1,32], index: 0, kind: input, shape index: {}]
  %s1 = inlined_call_operand.vmem [shape: f32[1,32], index: 1, kind: input, shape index: {}]
  %s2 = inlined_call_operand.vmem [shape: f32[1,32], index: 2, kind: output, shape index: {}]
  %v3 = vld [vmem:[%s0] sm:$0x1]
  %v4 = vld [vmem:[%s1] sm:$0x1]
  %5 = xla_tuple %v3, %v4
  %6 = xla_tuple %5
  %v7 = vsub.f32 %v3, %v4
  %8 = xla_tuple %v7
  %9 = vst [vmem:[%s2] sm:$0x1] %v7

// kernel: rel_floor_one_hot_encoder.1
$region0: #{rel_floor_one_hot_encoder.1}
  #allocation0 [shape = 'u32[]', space=smem, size = 0x4, offset = 0x4, fixed_abs, tag = 'smem constant byte address 0x4 - core index']
  #allocation1 [shape = 'u32[144,128]{1,0:T(1,128)}', space=vmem, size = 0x12000, scoped, tag = 'internal scratch']
  %s0 = inlined_call_operand.vmem [shape: s32[8,2], index: 0, kind: input, shape index: {}]
  %s1 = inlined_call_operand.vmem [shape: bf16[8,32], index: 1, kind: input, shape index: {}]
  %s2 = inlined_call_operand.vmem [shape: bf16[32,32], index: 2, kind: input, shape index: {}]
  %s3 = inlined_call_operand.vmem [shape: f32[1,32], index: 3, kind: input, shape index: {}]
  %s4 = inlined_call_operand.vmem [shape: f32[1,32], index: 4, kind: input, shape index: {}]
  %s5 = inlined_call_operand.hbm [shape: f32[8,32], index: 5, kind: output, shape index: {}]
  %s6 = sld [smem:[#allocation0]]
  $region30: #{rel_floor_one_hot_encoder.1} parent=0
    _
  %s8 = ssub.s32 1, %s6
  %s9 = scalar_select 0, %s8, %s6
  $region1: #{rel_floor_one_hot_encoder.1} parent=0
    #allocation2 [shape = 'u8[4096]{0}', space=vmem, size = 0x1000, scoped, tag = 'output window, operand 0, single buffered']
    #allocation3 [shape = 's32[1]{0}', space=sflag, size = 0x4, scoped, tag = 'scoped memory for rel_floor_one_hot_encoder.1']
    %10 = vsyncpa [#allocation3], 0
    // Predicated region
    $region2: #{rel_floor_one_hot_encoder.1} parent=1 // pred_check
      _
    $region3: #{rel_floor_one_hot_encoder.1} parent=1 // pred_check_branch
      %12 = sbr.rel (0) target = $region5
    $region4: #{rel_floor_one_hot_encoder.1} parent=1 // pred_region
      _
    $region5: #{rel_floor_one_hot_encoder.1} parent=1 // pred_fallthru
      _
    // Predicated region
    $region6: #{rel_floor_one_hot_encoder.1} parent=1 // pred_check
      _
    $region7: #{rel_floor_one_hot_encoder.1} parent=1 // pred_check_branch
      %14 = sbr.rel (0) target = $region9
    $region8: #{rel_floor_one_hot_encoder.1} parent=1 // pred_region
      _
    $region9: #{rel_floor_one_hot_encoder.1} parent=1 // pred_fallthru
      _
    // Predicated region
    $region10: #{rel_floor_one_hot_encoder.1} parent=1 // pred_check
      _
    $region11: #{rel_floor_one_hot_encoder.1} parent=1 // pred_check_branch
      %16 = sbr.rel (0) target = $region13
    $region12: #{rel_floor_one_hot_encoder.1} parent=1 // pred_region
      _
    $region13: #{rel_floor_one_hot_encoder.1} parent=1 // pred_fallthru
      _
    // Predicated region
    $region14: #{rel_floor_one_hot_encoder.1} parent=1 // pred_check
      _
    $region15: #{rel_floor_one_hot_encoder.1} parent=1 // pred_check_branch
      %18 = sbr.rel (0) target = $region17
    $region16: #{rel_floor_one_hot_encoder.1} parent=1 // pred_region
      _
    $region17: #{rel_floor_one_hot_encoder.1} parent=1 // pred_fallthru
      _
    // Predicated region
    $region18: #{rel_floor_one_hot_encoder.1} parent=1 // pred_check
      _
    $region19: #{rel_floor_one_hot_encoder.1} parent=1 // pred_check_branch
      %20 = sbr.rel (0) target = $region21
    $region20: #{rel_floor_one_hot_encoder.1} parent=1 // pred_region
      _
    $region21: #{rel_floor_one_hot_encoder.1} parent=1 // pred_fallthru
      _
    %v22 = vld [vmem:[%s0] sm:$0xff]
    %23 = vrot.lane.b32.xlu0 %v22, 127
    %v24 = vpop.permute.xlu0 %23
    %vm25 = vcmp.eq.s32.totalorder %v22, %v24
    %v26 = vsel %vm25, 1, 0
    %v27 = vcvt.s32.f32 %v26
    %v28 = vld [vmem:[%s1] sm:$0xf]
    %v29 = vld [vmem:[%s2] sm:$0xf]
    %v30 = vld [vmem:[%s2 + $0x4] sm:$0xf]
    %v31 = vld [vmem:[%s2 + $0x8] sm:$0xf]
    %v32 = vld [vmem:[%s2 + $0xc] sm:$0xf]
    %v33 = vld [vmem:[%s3] sm:$0x1]
    %35 = vset.pattern.permute.xlu0 0
    %36 = vperm.xlu0 %35, %v27
    %v37 = vpop.permute.xlu0 %36
    %v40 = vlaneseq
    %v41 = vshrl.u32 %v40, 7
    %v42 = vsub.s32 0, %v41
    %v43 = vrot.slane %v33, %v42
    %v45 = vmul.f32 %v37, %v43
    %v50 = vunpack.c.l.b16 %v29
    %v51 = vunpack.c.l.b16 %v30
    %v52 = vunpack.c.l.b16 %v31
    %v53 = vunpack.c.l.b16 %v32
    %v54 = vpack.c.b16 %v51, %v50
    %v55 = vpack.c.b16 %v53, %v52
    %vm58 = vcmask 261120
    %v60 = vsel %vm58, %v28, 0
    %62 = vmatprep.subr.bf16.mxu0 0
    %63 = vmatpush1.bf16.msra.mxu0 0
    %64 = vmatprep.subr.bf16.mxu0 0
    %65 = vmatpush1.bf16.msra.mxu0 0
    %66 = vmatprep.subr.bf16.mxu0 0
    %67 = vmatpush1.bf16.msra.mxu0 0
    %68 = vmatprep.subr.bf16.mxu0 0
    %69 = vmatpush1.bf16.msra.mxu0 0
    %70 = vmatprep.subr.bf16.mxu0 0
    %71 = vmatpush1.bf16.msra.mxu0 0
    %72 = vmatprep.subr.bf16.mxu0 0
    %73 = vmatpush1.bf16.msra.mxu0 0
    %74 = vmatprep.subr.bf16.mxu0 0
    %75 = vmatpush1.bf16.msra.mxu0 %v55
    %76 = vmatprep.subr.bf16.mxu0 0
    %77 = vmatpush1.bf16.msra.mxu0 %v54
    %78 = vmatprep.subr.bf16.mxu0 0
    %79 = vmatpush2.bf16.msra.mxu0 0
    %80 = vmatprep.subr.bf16.mxu0 0
    %81 = vmatpush2.bf16.msra.mxu0 0
    %82 = vmatprep.subr.bf16.mxu0 0
    %83 = vmatpush2.bf16.msra.mxu0 0
    %84 = vmatprep.subr.bf16.mxu0 0
    %85 = vmatpush2.bf16.msra.mxu0 0
    %86 = vmatprep.subr.bf16.mxu0 0
    %87 = vmatpush2.bf16.msra.mxu0 0
    %88 = vmatprep.subr.bf16.mxu0 0
    %89 = vmatpush2.bf16.msra.mxu0 0
    %90 = vmatprep.subr.bf16.mxu0 0
    %91 = vmatpush2.bf16.msra.mxu0 0
    %92 = vmatprep.subr.bf16.mxu0 0
    %93 = vmatpush2.bf16.msra.mxu0 0
    %94 = vmatprep.mubr.bf16.mxu0 0
    %95 = vmatmul.mubr.bf16.gmra.mxu0 %v60
    %v96 = vpop.f32.mrf.mxu0
    %v97 = vadd.f32 %v45, %v96
    %v98 = vpop.f32.mrf.mxu0
    %v99 = vpop.f32.mrf.mxu0
    %v100 = vpop.f32.mrf.mxu0
    %101 = vdwg.mxu0
    %v102 = vld [vmem:[%s4] sm:$0x1]
    %v104 = vlaneseq
    %v105 = vshrl.u32 %v104, 7
    %v106 = vsub.s32 0, %v105
    %v107 = vrot.slane %v102, %v106
    %v109 = vadd.f32 %v97, %v107
    %110 = vst.msk [vmem:[#allocation2] sm:$0xff] %vm58, %v109
    // Predicated region
    $region22: #{rel_floor_one_hot_encoder.1} parent=1 // pred_check
      _
    $region23: #{rel_floor_one_hot_encoder.1} parent=1 // pred_check_branch
      %112 = sbr.rel (0) target = $region25
    $region24: #{rel_floor_one_hot_encoder.1} parent=1 // pred_region
      %s114 = ssub.s32 128, 128
      %115 = vsyncadd [#allocation3], %s114
      %s117 = sshll.u32 [#allocation2], 4
      %s118 = int_to_ptr.vmem [resolvable:$true] %s117
      %120 = dma.vmem_to_hbm [thread:$0]  %s118, 128, %s5, [#allocation3]
    $region25: #{rel_floor_one_hot_encoder.1} parent=1 // pred_fallthru
      _
    // Predicated region
    $region26: #{rel_floor_one_hot_encoder.1} parent=1 // pred_check
      _
    $region27: #{rel_floor_one_hot_encoder.1} parent=1 // pred_check_branch
      %122 = sbr.rel (0) target = $region29
    $region28: #{rel_floor_one_hot_encoder.1} parent=1 // pred_region
      %123 = dma.done [#allocation3], 128
    $region29: #{rel_floor_one_hot_encoder.1} parent=1 // pred_fallthru
      _
    %124 = vsyncpa [#allocation3], 1

</llo_original>
